<compile_context>
chip_gen: v5e
topology: v5e:2x2
jax: 0.10.0
libtpu: 0.0.40
codegen_flags: <defaults>
</compile_context>

<pallas_src>
import functools

import jax
import jax.numpy as jnp
from jax import lax
from jax.experimental import pallas as pl
from jax.experimental.pallas import tpu as pltpu


# ---------------------------------------------------------------------------
# One-time parameter packing (torch layout -> kernel matmul operands)
# ---------------------------------------------------------------------------
def _band_conv_weight(w, b, w_img):
    """torch Conv2d weight (Cout, Cin, 3, 3) + bias (Cout,) -> lane-banded
    matmul weight of shape (3*w_img*Cin + 1, w_img*Cout).

    Row order matches the in-kernel patch [dy=0 | dy=1 | dy=2 | ones], each dy
    block ordered (x_in, Cin).  Column order is (j, x_half, Cout) with
    x_out = 2*x_half + j so the 2x2 max-pool becomes two aligned half-lane
    maxes.  padding=1 along x is encoded by the band (absent x_in positions
    contribute zero); padding along y is handled in-kernel by a row mask.
    """
    cout, cin = w.shape[0], w.shape[1]
    wt = jnp.transpose(w, (2, 3, 1, 0))                        # (kh, kw, Cin, Cout)
    xi = jnp.arange(w_img)[None, :, None]                      # x_in
    xo = jnp.arange(w_img)[None, None, :]                      # x_out
    dx = jnp.arange(3)[:, None, None]
    band = (xi == xo + dx - 1).astype(w.dtype)                 # (3, w_img, w_img)
    body = jnp.einsum("axy,daef->dxeyf", band, wt)             # (kh, x_in, Cin, x_out, Cout)
    body = body.reshape(3 * w_img * cin, w_img, cout)
    body = body.reshape(3 * w_img * cin, w_img // 2, 2, cout)  # x_out -> (x_half, j)
    body = jnp.transpose(body, (0, 2, 1, 3)).reshape(3 * w_img * cin, w_img * cout)
    bias_row = jnp.tile(b, w_img)[None, :]                     # b[co] for every x_out column
    return jnp.concatenate([body, bias_row], axis=0)


def pack_params(params, h, w):
    """Fold all weights/biases into the 4 bf16 matmul operands the kernel uses.

    Biases become an extra trailing weight row (matched by a ones column built
    in the kernel) and torch's NCHW-flatten permutation for fc1 is folded in
    here, so the kernel needs no bias inputs, transposes or gathers.  Call once.
    """
    h3, w3 = h // 4, w // 4
    hid = params["w_fc1"].shape[0]
    c2 = params["w_conv2"].shape[0]

    w1b = _band_conv_weight(params["w_conv1"], params["b_conv1"], w)
    w2b = _band_conv_weight(params["w_conv2"], params["b_conv2"], w // 2)

    # fc1: torch flattens (B, C2, H3, W3) channel-major; the kernel's flattened
    # feature order is (y3, x3, c2) -> permute the weight rows once here.
    wf1 = params["w_fc1"].reshape(hid, c2, h3, w3)
    wf1 = jnp.transpose(wf1, (2, 3, 1, 0)).reshape(h3 * w3 * c2, hid)
    wf1 = jnp.concatenate([wf1, params["b_fc1"][None, :]], axis=0)

    wf2 = jnp.concatenate([params["w_fc2"].T, params["b_fc2"][None, :]], axis=0)

    cast = lambda a: a.astype(jnp.bfloat16)
    return {"w1": cast(w1b), "w2": cast(w2b), "wf1": cast(wf1), "wf2": cast(wf2)}


# ---------------------------------------------------------------------------
# Kernel
# ---------------------------------------------------------------------------
def _conv_patch(v, img_h):
    """3x3-conv patch builder (padding=1).  v: (B*img_h, L) activation with
    rows (b, y) and lanes (x, c).  Returns (B*img_h, 3*L + 1): the three
    row-shifted (dy-1 = -1, 0, +1) copies, zero-masked at each image's y-edges,
    plus a trailing ones column that picks up the bias row of the weight."""
    rows, lanes = v.shape
    zero_row = jnp.zeros((1, lanes), v.dtype)
    vp = jnp.concatenate([zero_row, v, zero_row], axis=0)      # (rows + 2, lanes)
    y = lax.broadcasted_iota(jnp.int32, (rows, 1), 0) % img_h
    pieces = []
    for dy in range(3):
        piece = vp[dy:dy + rows, :]                            # row r -> v[r + dy - 1]
        if dy == 0:
            piece = jnp.where(y >= 1, piece, 0.0)              # top edge of each image
        elif dy == 2:
            piece = jnp.where(y <= img_h - 2, piece, 0.0)      # bottom edge
        pieces.append(piece)
    pieces.append(jnp.ones((rows, 1), v.dtype))
    return jnp.concatenate(pieces, axis=1)


def _maxpool2x2(v):
    """2x2 / stride-2 max-pool.  v: (B*H, 2*Lh) with rows (b, y) and lanes
    (j, x_half, c) where x = 2*x_half + j.  Returns (B*H//2, Lh) with rows
    (b, y_half) and lanes (x_half, c).  Both maxes are aligned lane slices."""
    rows, lanes = v.shape
    v = v.reshape(rows // 2, 2 * lanes)                        # merge y row pairs onto lanes
    v = jnp.maximum(v[:, :lanes], v[:, lanes:])                # pool over y
    half = lanes // 2
    return jnp.maximum(v[:, :half], v[:, half:])               # pool over x (parity halves)


def _fused_forward_kernel(img_h, x_ref, w1_ref, w2_ref, wf1_ref, wf2_ref, o_ref):
    bf16, f32 = jnp.bfloat16, jnp.float32
    batch = x_ref.shape[0] // img_h

    # conv1 (+bias) as one banded matmul, then ReLU and 2x2 max-pool.
    p1 = _conv_patch(x_ref[...], img_h)                        # (B*H, 3*W*Cin + 1)
    a1 = jnp.dot(p1.astype(bf16), w1_ref[...], preferred_element_type=f32)
    q1 = _maxpool2x2(jnp.maximum(a1, 0.0))                     # (B*H/2, (W/2)*C1)

    # conv2 (+bias) + ReLU + pool.
    p2 = _conv_patch(q1, img_h // 2)                           # (B*H/2, 3*(W/2)*C1 + 1)
    a2 = jnp.dot(p2.astype(bf16), w2_ref[...], preferred_element_type=f32)
    q2 = _maxpool2x2(jnp.maximum(a2, 0.0))                     # (B*H/4, (W/4)*C2)

    # classifier: lane-merge flatten, biases folded in via a ones column.
    ones = jnp.ones((batch, 1), f32)
    feat = jnp.concatenate([q2.reshape(batch, -1), ones], axis=1)       # (B, 513)
    hidden = jnp.dot(feat.astype(bf16), wf1_ref[...], preferred_element_type=f32)
    hidden = jnp.maximum(hidden, 0.0)                                    # (B, 64)
    logits = jnp.dot(jnp.concatenate([hidden, ones], axis=1).astype(bf16),
                     wf2_ref[...], preferred_element_type=f32)           # (B, class_num)
    o_ref[...] = logits.astype(o_ref.dtype)


# ---------------------------------------------------------------------------
# Wrapper
# ---------------------------------------------------------------------------
def simple_model_forward(x_nchw, packed):
    """SimpleModel forward pass as a single fused Pallas TPU call.

    x_nchw: (B, 3, H, W) float32, NCHW like the torch module.
    packed: output of pack_params().
    """
    b, cin, h, w = x_nchw.shape
    assert h % 4 == 0 and w % 4 == 0
    class_num = packed["wf2"].shape[1]
    c1 = packed["w1"].shape[1] // w
    c2 = packed["w2"].shape[1] // (w // 2)
    hid = packed["wf1"].shape[1]

    # NCHW -> rows (b, y), lanes (x, cin): the only layout work outside the kernel.
    x2d = jnp.transpose(x_nchw, (0, 2, 3, 1)).reshape(b * h, w * cin)

    flops = 2 * (b * h * packed["w1"].shape[0] * (w * c1)
                 + b * (h // 2) * packed["w2"].shape[0] * ((w // 2) * c2)
                 + b * packed["wf1"].shape[0] * hid
                 + b * packed["wf2"].shape[0] * class_num)
    bytes_accessed = (x2d.size * x2d.dtype.itemsize + b * class_num * 4
                      + sum(v.size * v.dtype.itemsize for v in packed.values()))

    return pl.pallas_call(
        functools.partial(_fused_forward_kernel, h),
        out_shape=jax.ShapeDtypeStruct((b, class_num), x_nchw.dtype),
        in_specs=[pl.BlockSpec(memory_space=pltpu.MemorySpace.VMEM)] * 5,
        out_specs=pl.BlockSpec(memory_space=pltpu.MemorySpace.VMEM),
        cost_estimate=pl.CostEstimate(flops=flops, transcendentals=0,
                                      bytes_accessed=bytes_accessed),
    )(x2d, packed["w1"], packed["w2"], packed["wf1"], packed["wf2"])


def init_params(key, w=16, h=16, class_num=2):
    # TODO(synk): torch's default Kaiming/uniform init is not replicated; plain
    # scaled-normal init is used (forward-pass semantics are unaffected).
    ks = jax.random.split(key, 8)
    feat = 32 * (h // 4) * (w // 4)
    return {
        "w_conv1": jax.random.normal(ks[0], (16, 3, 3, 3), jnp.float32) * 0.1,
        "b_conv1": jax.random.normal(ks[1], (16,), jnp.float32) * 0.1,
        "w_conv2": jax.random.normal(ks[2], (32, 16, 3, 3), jnp.float32) * 0.1,
        "b_conv2": jax.random.normal(ks[3], (32,), jnp.float32) * 0.1,
        "w_fc1": jax.random.normal(ks[4], (64, feat), jnp.float32) * 0.05,
        "b_fc1": jax.random.normal(ks[5], (64,), jnp.float32) * 0.05,
        "w_fc2": jax.random.normal(ks[6], (class_num, 64), jnp.float32) * 0.05,
        "b_fc2": jax.random.normal(ks[7], (class_num,), jnp.float32) * 0.05,
    }


if __name__ == "__main__":
    key = jax.random.PRNGKey(0)
    k_x, k_p = jax.random.split(key)

    B, C, H, W = 2, 3, 16, 16          # SimpleModel expects 3 input channels
    class_num = 2
    x = jax.random.normal(k_x, (B, C, H, W), jnp.float32)
    params = init_params(k_p, w=W, h=H, class_num=class_num)

    # Fold all weight/bias layout work once, outside the hot path.
    packed = pack_params(params, h=H, w=W)

    fwd = jax.jit(simple_model_forward)
    out = jax.block_until_ready(fwd(x, packed))
    assert out.shape == (B, class_num), out.shape
    print("KERNEL_OK")
</pallas_src>

<mosaic_0001>
module attributes {stable_mosaic.version = 11 : i64} {
  func.func @_fused_forward_kernel(%arg0: memref<32x48xf32, #tpu.memory_space<vmem>>, %arg1: memref<145x256xbf16, #tpu.memory_space<vmem>>, %arg2: memref<385x256xbf16, #tpu.memory_space<vmem>>, %arg3: memref<513x64xbf16, #tpu.memory_space<vmem>>, %arg4: memref<65x2xbf16, #tpu.memory_space<vmem>>, %arg5: memref<2x2xf32, #tpu.memory_space<vmem>>) attributes {dimension_semantics = [], scalar_prefetch = 0 : i64, scratch_operands = 0 : i64, tpu.core_type = #tpu.core_type<tc>} {
    %c0 = arith.constant 0 : index
    %c0_0 = arith.constant 0 : index
    %0 = vector.load %arg0[%c0, %c0_0] : memref<32x48xf32, #tpu.memory_space<vmem>>, vector<32x48xf32>
    %cst = arith.constant 0.000000e+00 : f32
    %1 = vector.broadcast %cst : f32 to vector<1x48xf32>
    %2 = tpu.concatenate %1, %0, %1 in 0 : vector<1x48xf32>, vector<32x48xf32>, vector<1x48xf32> -> vector<34x48xf32>
    %3 = tpu.iota {dimensions = array<i32: 0>} : vector<32x1xi32>
    %c16_i32 = arith.constant 16 : i32
    %c0_i32 = arith.constant 0 : i32
    %4 = arith.cmpi eq, %c16_i32, %c0_i32 : i32
    %c1_i32 = arith.constant 1 : i32
    %5 = arith.select %4, %c1_i32, %c16_i32 : i32
    %6 = vector.broadcast %5 : i32 to vector<32x1xi32>
    %7 = arith.remsi %3, %6 : vector<32x1xi32>
    %c0_i32_1 = arith.constant 0 : i32
    %8 = vector.broadcast %c0_i32_1 : i32 to vector<32x1xi32>
    %9 = arith.cmpi ne, %7, %8 : vector<32x1xi32>
    %c0_i32_2 = arith.constant 0 : i32
    %10 = vector.broadcast %c0_i32_2 : i32 to vector<32x1xi32>
    %11 = arith.cmpi slt, %7, %10 : vector<32x1xi32>
    %c0_i32_3 = arith.constant 0 : i32
    %12 = arith.cmpi slt, %5, %c0_i32_3 : i32
    %13 = vector.broadcast %12 : i1 to vector<32x1xi1>
    %14 = vector.broadcast %13 : vector<32x1xi1> to vector<32x1xi1>
    %15 = arith.xori %11, %14 : vector<32x1xi1>
    %16 = arith.andi %15, %9 : vector<32x1xi1>
    %17 = vector.broadcast %5 : i32 to vector<32x1xi32>
    %18 = arith.addi %7, %17 : vector<32x1xi32>
    %19 = arith.select %16, %18, %7 : vector<32x1xi1>, vector<32x1xi32>
    %20 = vector.extract_strided_slice %2 {offsets = [0, 0], sizes = [32, 48], strides = [1, 1]} : vector<34x48xf32> to vector<32x48xf32>
    %c1_i32_4 = arith.constant 1 : i32
    %21 = vector.broadcast %c1_i32_4 : i32 to vector<32x1xi32>
    %22 = arith.cmpi sge, %19, %21 : vector<32x1xi32>
    %cst_5 = arith.constant 0.000000e+00 : f32
    %23 = vector.shape_cast %22 : vector<32x1xi1> to vector<32x1xi1>
    %24 = vector.broadcast %23 : vector<32x1xi1> to vector<32x48xi1>
    %25 = vector.broadcast %cst_5 : f32 to vector<32x48xf32>
    %26 = arith.select %24, %20, %25 : vector<32x48xi1>, vector<32x48xf32>
    %27 = vector.extract_strided_slice %2 {offsets = [1, 0], sizes = [32, 48], strides = [1, 1]} : vector<34x48xf32> to vector<32x48xf32>
    %28 = vector.extract_strided_slice %2 {offsets = [2, 0], sizes = [32, 48], strides = [1, 1]} : vector<34x48xf32> to vector<32x48xf32>
    %c14_i32 = arith.constant 14 : i32
    %29 = vector.broadcast %c14_i32 : i32 to vector<32x1xi32>
    %30 = arith.cmpi sle, %19, %29 : vector<32x1xi32>
    %cst_6 = arith.constant 0.000000e+00 : f32
    %31 = vector.shape_cast %30 : vector<32x1xi1> to vector<32x1xi1>
    %32 = vector.broadcast %31 : vector<32x1xi1> to vector<32x48xi1>
    %33 = vector.broadcast %cst_6 : f32 to vector<32x48xf32>
    %34 = arith.select %32, %28, %33 : vector<32x48xi1>, vector<32x48xf32>
    %cst_7 = arith.constant 1.000000e+00 : f32
    %35 = vector.broadcast %cst_7 : f32 to vector<32x1xf32>
    %36 = tpu.concatenate %26, %27, %34, %35 in 1 : vector<32x48xf32>, vector<32x48xf32>, vector<32x48xf32>, vector<32x1xf32> -> vector<32x145xf32>
    %37 = arith.truncf %36 : vector<32x145xf32> to vector<32x145xbf16>
    %c0_8 = arith.constant 0 : index
    %c0_9 = arith.constant 0 : index
    %38 = vector.load %arg1[%c0_8, %c0_9] : memref<145x256xbf16, #tpu.memory_space<vmem>>, vector<145x256xbf16>
    %cst_10 = arith.constant dense<0.000000e+00> : vector<32x256xf32>
    %39 = tpu.matmul %37, %38, %cst_10 {dimension_numbers = #tpu.dot_dimension_numbers<[1], [0], [0], [1], [0, 0, 1, 1], [], []>} : vector<32x145xbf16>, vector<145x256xbf16>, vector<32x256xf32> -> vector<32x256xf32>
    %cst_11 = arith.constant 0.000000e+00 : f32
    %40 = vector.broadcast %cst_11 : f32 to vector<32x256xf32>
    %41 = arith.maximumf %39, %40 : vector<32x256xf32>
    %42 = vector.shape_cast %41 : vector<32x256xf32> to vector<16x512xf32>
    %43 = vector.extract_strided_slice %42 {offsets = [0, 0], sizes = [16, 256], strides = [1, 1]} : vector<16x512xf32> to vector<16x256xf32>
    %44 = vector.extract_strided_slice %42 {offsets = [0, 256], sizes = [16, 256], strides = [1, 1]} : vector<16x512xf32> to vector<16x256xf32>
    %45 = arith.maximumf %43, %44 : vector<16x256xf32>
    %46 = vector.extract_strided_slice %45 {offsets = [0, 0], sizes = [16, 128], strides = [1, 1]} : vector<16x256xf32> to vector<16x128xf32>
    %47 = vector.extract_strided_slice %45 {offsets = [0, 128], sizes = [16, 128], strides = [1, 1]} : vector<16x256xf32> to vector<16x128xf32>
    %48 = arith.maximumf %46, %47 : vector<16x128xf32>
    %cst_12 = arith.constant 0.000000e+00 : f32
    %49 = vector.broadcast %cst_12 : f32 to vector<1x128xf32>
    %50 = tpu.concatenate %49, %48, %49 in 0 : vector<1x128xf32>, vector<16x128xf32>, vector<1x128xf32> -> vector<18x128xf32>
    %51 = tpu.iota {dimensions = array<i32: 0>} : vector<16x1xi32>
    %c8_i32 = arith.constant 8 : i32
    %c0_i32_13 = arith.constant 0 : i32
    %52 = arith.cmpi eq, %c8_i32, %c0_i32_13 : i32
    %c1_i32_14 = arith.constant 1 : i32
    %53 = arith.select %52, %c1_i32_14, %c8_i32 : i32
    %54 = vector.broadcast %53 : i32 to vector<16x1xi32>
    %55 = arith.remsi %51, %54 : vector<16x1xi32>
    %c0_i32_15 = arith.constant 0 : i32
    %56 = vector.broadcast %c0_i32_15 : i32 to vector<16x1xi32>
    %57 = arith.cmpi ne, %55, %56 : vector<16x1xi32>
    %c0_i32_16 = arith.constant 0 : i32
    %58 = vector.broadcast %c0_i32_16 : i32 to vector<16x1xi32>
    %59 = arith.cmpi slt, %55, %58 : vector<16x1xi32>
    %c0_i32_17 = arith.constant 0 : i32
    %60 = arith.cmpi slt, %53, %c0_i32_17 : i32
    %61 = vector.broadcast %60 : i1 to vector<16x1xi1>
    %62 = vector.broadcast %61 : vector<16x1xi1> to vector<16x1xi1>
    %63 = arith.xori %59, %62 : vector<16x1xi1>
    %64 = arith.andi %63, %57 : vector<16x1xi1>
    %65 = vector.broadcast %53 : i32 to vector<16x1xi32>
    %66 = arith.addi %55, %65 : vector<16x1xi32>
    %67 = arith.select %64, %66, %55 : vector<16x1xi1>, vector<16x1xi32>
    %68 = vector.extract_strided_slice %50 {offsets = [0, 0], sizes = [16, 128], strides = [1, 1]} : vector<18x128xf32> to vector<16x128xf32>
    %c1_i32_18 = arith.constant 1 : i32
    %69 = vector.broadcast %c1_i32_18 : i32 to vector<16x1xi32>
    %70 = arith.cmpi sge, %67, %69 : vector<16x1xi32>
    %cst_19 = arith.constant 0.000000e+00 : f32
    %71 = vector.shape_cast %70 : vector<16x1xi1> to vector<16x1xi1>
    %72 = vector.broadcast %71 : vector<16x1xi1> to vector<16x128xi1>
    %73 = vector.broadcast %cst_19 : f32 to vector<16x128xf32>
    %74 = arith.select %72, %68, %73 : vector<16x128xi1>, vector<16x128xf32>
    %75 = vector.extract_strided_slice %50 {offsets = [1, 0], sizes = [16, 128], strides = [1, 1]} : vector<18x128xf32> to vector<16x128xf32>
    %76 = vector.extract_strided_slice %50 {offsets = [2, 0], sizes = [16, 128], strides = [1, 1]} : vector<18x128xf32> to vector<16x128xf32>
    %c6_i32 = arith.constant 6 : i32
    %77 = vector.broadcast %c6_i32 : i32 to vector<16x1xi32>
    %78 = arith.cmpi sle, %67, %77 : vector<16x1xi32>
    %cst_20 = arith.constant 0.000000e+00 : f32
    %79 = vector.shape_cast %78 : vector<16x1xi1> to vector<16x1xi1>
    %80 = vector.broadcast %79 : vector<16x1xi1> to vector<16x128xi1>
    %81 = vector.broadcast %cst_20 : f32 to vector<16x128xf32>
    %82 = arith.select %80, %76, %81 : vector<16x128xi1>, vector<16x128xf32>
    %cst_21 = arith.constant 1.000000e+00 : f32
    %83 = vector.broadcast %cst_21 : f32 to vector<16x1xf32>
    %84 = tpu.concatenate %74, %75, %82, %83 in 1 : vector<16x128xf32>, vector<16x128xf32>, vector<16x128xf32>, vector<16x1xf32> -> vector<16x385xf32>
    %85 = arith.truncf %84 : vector<16x385xf32> to vector<16x385xbf16>
    %c0_22 = arith.constant 0 : index
    %c0_23 = arith.constant 0 : index
    %86 = vector.load %arg2[%c0_22, %c0_23] : memref<385x256xbf16, #tpu.memory_space<vmem>>, vector<385x256xbf16>
    %cst_24 = arith.constant dense<0.000000e+00> : vector<16x256xf32>
    %87 = tpu.matmul %85, %86, %cst_24 {dimension_numbers = #tpu.dot_dimension_numbers<[1], [0], [0], [1], [0, 0, 1, 1], [], []>} : vector<16x385xbf16>, vector<385x256xbf16>, vector<16x256xf32> -> vector<16x256xf32>
    %cst_25 = arith.constant 0.000000e+00 : f32
    %88 = vector.broadcast %cst_25 : f32 to vector<16x256xf32>
    %89 = arith.maximumf %87, %88 : vector<16x256xf32>
    %90 = vector.shape_cast %89 : vector<16x256xf32> to vector<8x512xf32>
    %91 = vector.extract_strided_slice %90 {offsets = [0, 0], sizes = [8, 256], strides = [1, 1]} : vector<8x512xf32> to vector<8x256xf32>
    %92 = vector.extract_strided_slice %90 {offsets = [0, 256], sizes = [8, 256], strides = [1, 1]} : vector<8x512xf32> to vector<8x256xf32>
    %93 = arith.maximumf %91, %92 : vector<8x256xf32>
    %94 = vector.extract_strided_slice %93 {offsets = [0, 0], sizes = [8, 128], strides = [1, 1]} : vector<8x256xf32> to vector<8x128xf32>
    %95 = vector.extract_strided_slice %93 {offsets = [0, 128], sizes = [8, 128], strides = [1, 1]} : vector<8x256xf32> to vector<8x128xf32>
    %96 = arith.maximumf %94, %95 : vector<8x128xf32>
    %cst_26 = arith.constant 1.000000e+00 : f32
    %97 = vector.broadcast %cst_26 : f32 to vector<2x1xf32>
    %98 = vector.shape_cast %96 : vector<8x128xf32> to vector<2x512xf32>
    %99 = tpu.concatenate %98, %97 in 1 : vector<2x512xf32>, vector<2x1xf32> -> vector<2x513xf32>
    %100 = arith.truncf %99 : vector<2x513xf32> to vector<2x513xbf16>
    %c0_27 = arith.constant 0 : index
    %c0_28 = arith.constant 0 : index
    %101 = vector.load %arg3[%c0_27, %c0_28] : memref<513x64xbf16, #tpu.memory_space<vmem>>, vector<513x64xbf16>
    %cst_29 = arith.constant dense<0.000000e+00> : vector<2x64xf32>
    %102 = tpu.matmul %100, %101, %cst_29 {dimension_numbers = #tpu.dot_dimension_numbers<[1], [0], [0], [1], [0, 0, 1, 1], [], []>} : vector<2x513xbf16>, vector<513x64xbf16>, vector<2x64xf32> -> vector<2x64xf32>
    %cst_30 = arith.constant 0.000000e+00 : f32
    %103 = vector.broadcast %cst_30 : f32 to vector<2x64xf32>
    %104 = arith.maximumf %102, %103 : vector<2x64xf32>
    %105 = tpu.concatenate %104, %97 in 1 : vector<2x64xf32>, vector<2x1xf32> -> vector<2x65xf32>
    %106 = arith.truncf %105 : vector<2x65xf32> to vector<2x65xbf16>
    %c0_31 = arith.constant 0 : index
    %c0_32 = arith.constant 0 : index
    %107 = vector.load %arg4[%c0_31, %c0_32] : memref<65x2xbf16, #tpu.memory_space<vmem>>, vector<65x2xbf16>
    %cst_33 = arith.constant dense<0.000000e+00> : vector<2x2xf32>
    %108 = tpu.matmul %106, %107, %cst_33 {dimension_numbers = #tpu.dot_dimension_numbers<[1], [0], [0], [1], [0, 0, 1, 1], [], []>} : vector<2x65xbf16>, vector<65x2xbf16>, vector<2x2xf32> -> vector<2x2xf32>
    %c0_34 = arith.constant 0 : index
    %c0_35 = arith.constant 0 : index
    %109 = vector.load %arg5[%c0_34, %c0_35] : memref<2x2xf32, #tpu.memory_space<vmem>>, vector<2x2xf32>
    tpu.vector_store %arg5[%c0_34, %c0_35], %108 {strides = array<i32>} : memref<2x2xf32, #tpu.memory_space<vmem>>, vector<2x2xf32>,
    return
  }
}

</mosaic_0001>

<llo_original>
// kernel: simple_model_forward.1
$region0: #{simple_model_forward.1}
  #allocation0 [shape = 'u32[]', space=smem, size = 0x4, offset = 0x4, fixed_abs, tag = 'smem constant byte address 0x4 - core index']
  #allocation1 [shape = 'u32[72,128]{1,0:T(1,128)}', space=vmem, size = 0x9000, scoped, tag = 'internal scratch']
  %s0 = inlined_call_operand.vmem [shape: f32[32,48], index: 0, kind: input, shape index: {}]
  %s1 = inlined_call_operand.vmem [shape: bf16[145,256], index: 1, kind: input, shape index: {}]
  %s2 = inlined_call_operand.vmem [shape: bf16[385,256], index: 2, kind: input, shape index: {}]
  %s3 = inlined_call_operand.vmem [shape: bf16[513,64], index: 3, kind: input, shape index: {}]
  %s4 = inlined_call_operand.vmem [shape: bf16[65,2], index: 4, kind: input, shape index: {}]
  %s5 = inlined_call_operand.hbm [shape: f32[2,2], index: 5, kind: output, shape index: {}]
  %s6 = sld [smem:[#allocation0]]
  $region30: #{simple_model_forward.1} parent=0
    _
  %s8 = ssub.s32 1, %s6
  %s9 = scalar_select 0, %s8, %s6
  $region1: #{simple_model_forward.1} parent=0
    #allocation2 [shape = 'u8[1024]{0}', space=vmem, size = 0x400, scoped, tag = 'output window, operand 0, single buffered']
    #allocation3 [shape = 's32[1]{0}', space=sflag, size = 0x4, scoped, tag = 'scoped memory for simple_model_forward.1']
    %10 = vsyncpa [#allocation3], 0
    // Predicated region
    $region2: #{simple_model_forward.1} parent=1 // pred_check
      _
    $region3: #{simple_model_forward.1} parent=1 // pred_check_branch
      %12 = sbr.rel (0) target = $region5
    $region4: #{simple_model_forward.1} parent=1 // pred_region
      _
    $region5: #{simple_model_forward.1} parent=1 // pred_fallthru
      _
    // Predicated region
    $region6: #{simple_model_forward.1} parent=1 // pred_check
      _
    $region7: #{simple_model_forward.1} parent=1 // pred_check_branch
      %14 = sbr.rel (0) target = $region9
    $region8: #{simple_model_forward.1} parent=1 // pred_region
      _
    $region9: #{simple_model_forward.1} parent=1 // pred_fallthru
      _
    // Predicated region
    $region10: #{simple_model_forward.1} parent=1 // pred_check
      _
    $region11: #{simple_model_forward.1} parent=1 // pred_check_branch
      %16 = sbr.rel (0) target = $region13
    $region12: #{simple_model_forward.1} parent=1 // pred_region
      _
    $region13: #{simple_model_forward.1} parent=1 // pred_fallthru
      _
    // Predicated region
    $region14: #{simple_model_forward.1} parent=1 // pred_check
      _
    $region15: #{simple_model_forward.1} parent=1 // pred_check_branch
      %18 = sbr.rel (0) target = $region17
    $region16: #{simple_model_forward.1} parent=1 // pred_region
      _
    $region17: #{simple_model_forward.1} parent=1 // pred_fallthru
      _
    // Predicated region
    $region18: #{simple_model_forward.1} parent=1 // pred_check
      _
    $region19: #{simple_model_forward.1} parent=1 // pred_check_branch
      %20 = sbr.rel (0) target = $region21
    $region20: #{simple_model_forward.1} parent=1 // pred_region
      _
    $region21: #{simple_model_forward.1} parent=1 // pred_fallthru
      _
    %v22 = vld [vmem:[%s0] sm:$0xff]
    %v23 = vld [vmem:[%s0 + $0x8] sm:$0xff]
    %v24 = vld [vmem:[%s0 + $0x10] sm:$0xff]
    %v25 = vld [vmem:[%s0 + $0x18] sm:$0xff]
    %vm30 = vcmask 1040384
    %v31 = vrot.slane %v22, 7
    %v32 = vrot.slane %v23, 7
    %v33 = vsel %vm30, %v31, %v32
    %v34 = vrot.slane %v24, 7
    %v35 = vsel %vm30, %v32, %v34
    %v36 = vrot.slane %v25, 7
    %v37 = vsel %vm30, %v34, %v36
    %v43 = vsel %vm30, 0.0, %v31
    %v44 = vsel %vm30, %v36, 0.0
    %v45 = vlaneseq
    %v46 = vshrl.u32 %v45, 7
    %v47 = vadd.s32 %v46, 8
    %v48 = vadd.s32 %v46, 16
    %v49 = vadd.s32 %v46, 24
    %vm50 = vcmp.lt.s32.totalorder %v46, 0
    %v51 = vsub.s32 0, %v46
    %v52 = vsel %vm50, %v51, %v46
    %v53 = vshrl.u32 %v52, 4
    %v54 = vand.u32 %v52, 15
    %v55 = vsub.s32 0, %v54
    %v56 = vsel %vm50, %v55, %v54
    %vm57 = vcmp.lt.s32.totalorder %v47, 0
    %v58 = vsub.s32 0, %v47
    %v59 = vsel %vm57, %v58, %v47
    %v60 = vshrl.u32 %v59, 4
    %v61 = vand.u32 %v59, 15
    %v62 = vsub.s32 0, %v61
    %v63 = vsel %vm57, %v62, %v61
    %vm64 = vcmp.lt.s32.totalorder %v48, 0
    %v65 = vsub.s32 0, %v48
    %v66 = vsel %vm64, %v65, %v48
    %v67 = vshrl.u32 %v66, 4
    %v68 = vand.u32 %v66, 15
    %v69 = vsub.s32 0, %v68
    %v70 = vsel %vm64, %v69, %v68
    %vm71 = vcmp.lt.s32.totalorder %v49, 0
    %v72 = vsub.s32 0, %v49
    %v73 = vsel %vm71, %v72, %v49
    %v74 = vshrl.u32 %v73, 4
    %v75 = vand.u32 %v73, 15
    %v76 = vsub.s32 0, %v75
    %v77 = vsel %vm71, %v76, %v75
    %vm78 = vcmp.ne.s32.totalorder %v56, 0
    %vm79 = vcmp.ne.s32.totalorder %v63, 0
    %vm80 = vcmp.ne.s32.totalorder %v70, 0
    %vm81 = vcmp.ne.s32.totalorder %v77, 0
    %vm82 = vcmp.lt.s32.totalorder %v56, 0
    %vm83 = vcmp.lt.s32.totalorder %v63, 0
    %vm84 = vcmp.lt.s32.totalorder %v70, 0
    %vm85 = vcmp.lt.s32.totalorder %v77, 0
    %vm86 = vmand %vm82, %vm78
    %vm87 = vmand %vm83, %vm79
    %vm88 = vmand %vm84, %vm80
    %vm89 = vmand %vm85, %vm81
    %v90 = vadd.s32 %v56, 16
    %v91 = vadd.s32 %v63, 16
    %v92 = vadd.s32 %v70, 16
    %v93 = vadd.s32 %v77, 16
    %v94 = vsel %vm86, %v90, %v56
    %v95 = vsel %vm87, %v91, %v63
    %v96 = vsel %vm88, %v92, %v70
    %v97 = vsel %vm89, %v93, %v77
    %vm98 = vcmp.ge.s32.totalorder %v94, 1
    %vm99 = vcmp.ge.s32.totalorder %v95, 1
    %vm100 = vcmp.ge.s32.totalorder %v96, 1
    %vm101 = vcmp.ge.s32.totalorder %v97, 1
    %v102 = vsel %vm98, 1, 0
    %v103 = vsel %vm99, 1, 0
    %v104 = vsel %vm100, 1, 0
    %v105 = vsel %vm101, 1, 0
    %vm106 = vcmp.eq.s32.totalorder %v102, 1
    %vm107 = vcmp.eq.s32.totalorder %v103, 1
    %vm108 = vcmp.eq.s32.totalorder %v104, 1
    %vm109 = vcmp.eq.s32.totalorder %v105, 1
    %v110 = vsel %vm106, %v43, 0.0
    %v111 = vsel %vm107, %v33, 0.0
    %v112 = vsel %vm108, %v35, 0.0
    %v113 = vsel %vm109, %v37, 0.0
    %vm114 = vcmp.le.s32.totalorder %v94, 14
    %vm115 = vcmp.le.s32.totalorder %v95, 14
    %vm116 = vcmp.le.s32.totalorder %v96, 14
    %vm117 = vcmp.le.s32.totalorder %v97, 14
    %v118 = vsel %vm114, 1, 0
    %v119 = vsel %vm115, 1, 0
    %v120 = vsel %vm116, 1, 0
    %v121 = vsel %vm117, 1, 0
    %vm122 = vcmp.eq.s32.totalorder %v118, 1
    %vm123 = vcmp.eq.s32.totalorder %v119, 1
    %vm124 = vcmp.eq.s32.totalorder %v120, 1
    %vm125 = vcmp.eq.s32.totalorder %v121, 1
    %vm128 = vcmask 1045504
    %v129 = vrot.slane %v43, 2
    %v130 = vrot.slane %v33, 2
    %v131 = vsel %vm128, %v129, %v130
    %v132 = vrot.slane %v35, 2
    %v133 = vsel %vm128, %v130, %v132
    %v134 = vrot.slane %v37, 2
    %v135 = vsel %vm128, %v132, %v134
    %v136 = vrot.slane %v44, 2
    %v137 = vsel %vm128, %v134, %v136
    %v142 = vsel %vm122, %v131, 0.0
    %v143 = vsel %vm123, %v133, 0.0
    %v144 = vsel %vm124, %v135, 0.0
    %v145 = vsel %vm125, %v137, 0.0
    %vm146 = vcmask 1046528
    %v147 = vrot.slane %v43, 1
    %v148 = vrot.slane %v33, 1
    %v149 = vsel %vm146, %v147, %v148
    %v150 = vrot.slane %v35, 1
    %v151 = vsel %vm146, %v148, %v150
    %v152 = vrot.slane %v37, 1
    %v153 = vsel %vm146, %v150, %v152
    %v154 = vrot.slane %v44, 1
    %v155 = vsel %vm146, %v152, %v154
    %156 = vrot.lane.b32.xlu0 %v149, 48
    %v157 = vpop.permute.xlu0 %156
    %158 = vrot.lane.b32.xlu0 %v151, 48
    %v159 = vpop.permute.xlu0 %158
    %160 = vrot.lane.b32.xlu0 %v153, 48
    %v161 = vpop.permute.xlu0 %160
    %162 = vrot.lane.b32.xlu0 %v155, 48
    %v163 = vpop.permute.xlu0 %162
    %172 = vrot.lane.b32.xlu0 %v142, 96
    %v173 = vpop.permute.xlu0 %172
    %174 = vrot.lane.b32.xlu0 %v143, 96
    %v175 = vpop.permute.xlu0 %174
    %176 = vrot.lane.b32.xlu0 %v144, 96
    %v177 = vpop.permute.xlu0 %176
    %178 = vrot.lane.b32.xlu0 %v145, 96
    %v179 = vpop.permute.xlu0 %178
    %vm184 = vcmask 392192
    %v185 = vsel %vm184, %v110, %v157
    %v186 = vsel %vm184, %v111, %v159
    %v187 = vsel %vm184, %v112, %v161
    %v188 = vsel %vm184, %v113, %v163
    %vm189 = vcmask 785408
    %v190 = vsel %vm189, %v185, %v173
    %v191 = vsel %vm189, %v186, %v175
    %v192 = vsel %vm189, %v187, %v177
    %v193 = vsel %vm189, %v188, %v179
    %vm194 = vcmask 130048
    %v195 = vsel %vm194, %v173, 1.0
    %v196 = vsel %vm194, %v175, 1.0
    %v197 = vsel %vm194, %v177, 1.0
    %v198 = vsel %vm194, %v179, 1.0
    %v199 = vpack.c.bf16 %v191, %v190
    %v200 = vpack.c.bf16 %v196, %v195
    %v201 = vpack.c.bf16 %v193, %v192
    %v202 = vpack.c.bf16 %v198, %v197
    %v203 = vld [vmem:[%s1] sm:$0xff]
    %v204 = vld [vmem:[%s1 + $0x8] sm:$0xff]
    %v205 = vld [vmem:[%s1 + $0x10] sm:$0xff]
    %v206 = vld [vmem:[%s1 + $0x18] sm:$0xff]
    %v207 = vld [vmem:[%s1 + $0x20] sm:$0xff]
    %v208 = vld [vmem:[%s1 + $0x28] sm:$0xff]
    %v209 = vld [vmem:[%s1 + $0x30] sm:$0xff]
    %v210 = vld [vmem:[%s1 + $0x38] sm:$0xff]
    %v211 = vld [vmem:[%s1 + $0x40] sm:$0xff]
    %v212 = vld [vmem:[%s1 + $0x48] sm:$0xff]
    %v213 = vld [vmem:[%s1 + $0x50] sm:$0xff]
    %v214 = vld [vmem:[%s1 + $0x58] sm:$0xff]
    %v215 = vld [vmem:[%s1 + $0x60] sm:$0xff]
    %v216 = vld [vmem:[%s1 + $0x68] sm:$0xff]
    %v217 = vld [vmem:[%s1 + $0x70] sm:$0xff]
    %v218 = vld [vmem:[%s1 + $0x78] sm:$0xff]
    %v219 = vld [vmem:[%s1 + $0x80] sm:$0xff]
    %v220 = vld [vmem:[%s1 + $0x88] sm:$0xff]
    %v221 = vld [vmem:[%s1 + $0x90] sm:$0x11]
    %v241 = vunpack.c.l.b16 %v203
    %v242 = vunpack.c.h.b16 %v203
    %v243 = vunpack.c.l.b16 %v204
    %v244 = vunpack.c.h.b16 %v204
    %v245 = vunpack.c.l.b16 %v205
    %v246 = vunpack.c.h.b16 %v205
    %v247 = vunpack.c.l.b16 %v206
    %v248 = vunpack.c.h.b16 %v206
    %v249 = vunpack.c.l.b16 %v207
    %v250 = vunpack.c.h.b16 %v207
    %v251 = vunpack.c.l.b16 %v208
    %v252 = vunpack.c.h.b16 %v208
    %v253 = vunpack.c.l.b16 %v209
    %v254 = vunpack.c.h.b16 %v209
    %v255 = vunpack.c.l.b16 %v210
    %v256 = vunpack.c.h.b16 %v210
    %v257 = vunpack.c.l.b16 %v211
    %v258 = vunpack.c.h.b16 %v211
    %v259 = vunpack.c.l.b16 %v212
    %v260 = vunpack.c.h.b16 %v212
    %v261 = vunpack.c.l.b16 %v213
    %v262 = vunpack.c.h.b16 %v213
    %v263 = vunpack.c.l.b16 %v214
    %v264 = vunpack.c.h.b16 %v214
    %v265 = vunpack.c.l.b16 %v215
    %v266 = vunpack.c.h.b16 %v215
    %v267 = vunpack.c.l.b16 %v216
    %v268 = vunpack.c.h.b16 %v216
    %v269 = vunpack.c.l.b16 %v217
    %v270 = vunpack.c.h.b16 %v217
    %v271 = vunpack.c.l.b16 %v218
    %v272 = vunpack.c.h.b16 %v218
    %v273 = vunpack.c.l.b16 %v219
    %v274 = vunpack.c.h.b16 %v219
    %v275 = vunpack.c.l.b16 %v220
    %v276 = vunpack.c.h.b16 %v220
    %v277 = vunpack.c.l.b16 %v221
    %v278 = vunpack.c.h.b16 %v221
    %v279 = vpack.c.b16 %v243, %v241
    %v280 = vpack.c.b16 %v244, %v242
    %v281 = vpack.c.b16 %v247, %v245
    %v282 = vpack.c.b16 %v248, %v246
    %v283 = vpack.c.b16 %v251, %v249
    %v284 = vpack.c.b16 %v252, %v250
    %v285 = vpack.c.b16 %v255, %v253
    %v286 = vpack.c.b16 %v256, %v254
    %v287 = vpack.c.b16 %v259, %v257
    %v288 = vpack.c.b16 %v260, %v258
    %v289 = vpack.c.b16 %v263, %v261
    %v290 = vpack.c.b16 %v264, %v262
    %v291 = vpack.c.b16 %v267, %v265
    %v292 = vpack.c.b16 %v268, %v266
    %v293 = vpack.c.b16 %v271, %v269
    %v294 = vpack.c.b16 %v272, %v270
    %v295 = vpack.c.b16 %v275, %v273
    %v296 = vpack.c.b16 %v276, %v274
    %v297 = vpack.c.b16 %v277, %v277
    %v298 = vpack.c.b16 %v278, %v278
    %vm317 = vcmask 138240
    %v319 = vsel %vm317, %v200, 0
    %v322 = vsel %vm317, %v202, 0
    %v324 = vsel 0, 4294967295, 65535
    %v325 = vsel %vm30, %v324, 0
    %v327 = vand.u32 %v297, %v325
    %v330 = vand.u32 %v298, %v325
    %332 = vmatpush.bf16.msra.mxu0 %v293
    %333 = vmatpush.bf16.msra.mxu0 %v291
    %334 = vmatpush.bf16.msra.mxu0 %v289
    %335 = vmatpush.bf16.msra.mxu0 %v287
    %336 = vmatpush.bf16.msra.mxu0 %v285
    %337 = vmatpush.bf16.msra.mxu0 %v283
    %338 = vmatpush.bf16.msra.mxu0 %v281
    %339 = vmatpush.bf16.msra.mxu0 %v279
    %340 = vmatmul.bf16.gmra.mxu0 %v199
    %v341 = vpop.f32.mrf.mxu0
    %v342 = vadd.f32 0.0, %v341
    %v343 = vpop.f32.mrf.mxu0
    %v344 = vadd.f32 0.0, %v343
    %345 = vmatmul.bf16.gmra.mxu0 %v201
    %v346 = vpop.f32.mrf.mxu0
    %v347 = vadd.f32 0.0, %v346
    %v348 = vpop.f32.mrf.mxu0
    %v349 = vadd.f32 0.0, %v348
    %350 = vdwg.mxu0
    %351 = vmatpush.bf16.msra.mxu0 0
    %352 = vmatpush.bf16.msra.mxu0 0
    %353 = vmatpush.bf16.msra.mxu0 0
    %354 = vmatpush.bf16.msra.mxu0 0
    %355 = vmatpush.bf16.msra.mxu0 0
    %356 = vmatpush.bf16.msra.mxu0 0
    %357 = vmatpush.bf16.msra.mxu0 %v327
    %358 = vmatpush.bf16.msra.mxu0 %v295
    %359 = vmatmul.bf16.gmra.mxu0 %v319
    %v360 = vpop.f32.mrf.mxu0
    %v361 = vadd.f32 %v342, %v360
    %v362 = vpop.f32.mrf.mxu0
    %v363 = vadd.f32 %v344, %v362
    %364 = vmatmul.bf16.gmra.mxu0 %v322
    %v365 = vpop.f32.mrf.mxu0
    %v366 = vadd.f32 %v347, %v365
    %v367 = vpop.f32.mrf.mxu0
    %v368 = vadd.f32 %v349, %v367
    %369 = vdwg.mxu0
    %370 = vmatpush.bf16.msra.mxu0 %v294
    %371 = vmatpush.bf16.msra.mxu0 %v292
    %372 = vmatpush.bf16.msra.mxu0 %v290
    %373 = vmatpush.bf16.msra.mxu0 %v288
    %374 = vmatpush.bf16.msra.mxu0 %v286
    %375 = vmatpush.bf16.msra.mxu0 %v284
    %376 = vmatpush.bf16.msra.mxu0 %v282
    %377 = vmatpush.bf16.msra.mxu0 %v280
    %378 = vmatmul.bf16.gmra.mxu0 %v199
    %v379 = vpop.f32.mrf.mxu0
    %v380 = vadd.f32 0.0, %v379
    %v381 = vpop.f32.mrf.mxu0
    %v382 = vadd.f32 0.0, %v381
    %383 = vmatmul.bf16.gmra.mxu0 %v201
    %v384 = vpop.f32.mrf.mxu0
    %v385 = vadd.f32 0.0, %v384
    %v386 = vpop.f32.mrf.mxu0
    %v387 = vadd.f32 0.0, %v386
    %388 = vdwg.mxu0
    %389 = vmatpush.bf16.msra.mxu0 0
    %390 = vmatpush.bf16.msra.mxu0 0
    %391 = vmatpush.bf16.msra.mxu0 0
    %392 = vmatpush.bf16.msra.mxu0 0
    %393 = vmatpush.bf16.msra.mxu0 0
    %394 = vmatpush.bf16.msra.mxu0 0
    %395 = vmatpush.bf16.msra.mxu0 %v330
    %396 = vmatpush.bf16.msra.mxu0 %v296
    %397 = vmatmul.bf16.gmra.mxu0 %v319
    %v398 = vpop.f32.mrf.mxu0
    %v399 = vadd.f32 %v380, %v398
    %v400 = vpop.f32.mrf.mxu0
    %v401 = vadd.f32 %v382, %v400
    %402 = vmatmul.bf16.gmra.mxu0 %v322
    %v403 = vpop.f32.mrf.mxu0
    %v404 = vadd.f32 %v385, %v403
    %v405 = vpop.f32.mrf.mxu0
    %v406 = vadd.f32 %v387, %v405
    %407 = vdwg.mxu0
    %v408 = vmax.f32 %v361, 0.0
    %v409 = vmax.f32 %v399, 0.0
    %v410 = vmax.f32 %v363, 0.0
    %v411 = vmax.f32 %v401, 0.0
    %v412 = vmax.f32 %v366, 0.0
    %v413 = vmax.f32 %v404, 0.0
    %v414 = vmax.f32 %v368, 0.0
    %v415 = vmax.f32 %v406, 0.0
    %v424 = vrot.slane %v409, 4
    %v425 = vrot.slane %v411, 4
    %v426 = vrot.slane %v413, 4
    %v427 = vrot.slane %v415, 4
    %vm428 = vcmask 1043456
    %v429 = vsel %vm428, %v408, %v424
    %v430 = vsel %vm428, %v424, %v408
    %v431 = vrot.slane %v430, 4
    %v432 = vsel %vm428, %v410, %v425
    %v433 = vsel %vm428, %v425, %v410
    %v434 = vrot.slane %v433, 4
    %v435 = vsel %vm428, %v412, %v426
    %v436 = vsel %vm428, %v426, %v412
    %v437 = vrot.slane %v436, 4
    %v438 = vsel %vm428, %v414, %v427
    %v439 = vsel %vm428, %v427, %v414
    %v440 = vrot.slane %v439, 4
    %v450 = vunpack.c.l.s4 1966171168
    %v451 = vunpack.c.0.s8 %v450
    %v452 = vperm.slane %v429, %v451
    %v454 = vunpack.c.l.s4 1966171168
    %v455 = vunpack.c.0.s8 %v454
    %v456 = vperm.slane %v431, %v455
    %v458 = vunpack.c.l.s4 1966171168
    %v459 = vunpack.c.0.s8 %v458
    %v460 = vperm.slane %v432, %v459
    %v462 = vunpack.c.l.s4 1966171168
    %v463 = vunpack.c.0.s8 %v462
    %v464 = vperm.slane %v434, %v463
    %v466 = vunpack.c.l.s4 1966171168
    %v467 = vunpack.c.0.s8 %v466
    %v468 = vperm.slane %v435, %v467
    %v470 = vunpack.c.l.s4 1966171168
    %v471 = vunpack.c.0.s8 %v470
    %v472 = vperm.slane %v437, %v471
    %v474 = vunpack.c.l.s4 1966171168
    %v475 = vunpack.c.0.s8 %v474
    %v476 = vperm.slane %v438, %v475
    %v478 = vunpack.c.l.s4 1966171168
    %v479 = vunpack.c.0.s8 %v478
    %v480 = vperm.slane %v440, %v479
    %v489 = vrot.slane %v452, 4
    %v490 = vrot.slane %v456, 4
    %v491 = vrot.slane %v460, 4
    %v492 = vrot.slane %v464, 4
    %v493 = vrot.slane %v468, 4
    %v494 = vrot.slane %v472, 4
    %v495 = vrot.slane %v476, 4
    %v496 = vrot.slane %v480, 4
    %v505 = vmax.f32 %v452, %v489
    %v506 = vmax.f32 %v456, %v490
    %v507 = vmax.f32 %v460, %v491
    %v508 = vmax.f32 %v464, %v492
    %v509 = vmax.f32 %v468, %v493
    %v510 = vmax.f32 %v472, %v494
    %v511 = vmax.f32 %v476, %v495
    %v512 = vmax.f32 %v480, %v496
    %v521 = vrot.slane %v505, 2
    %v522 = vrot.slane %v506, 2
    %v523 = vrot.slane %v507, 2
    %v524 = vrot.slane %v508, 2
    %v525 = vrot.slane %v509, 2
    %v526 = vrot.slane %v510, 2
    %v527 = vrot.slane %v511, 2
    %v528 = vrot.slane %v512, 2
    %v537 = vmax.f32 %v505, %v521
    %v538 = vmax.f32 %v506, %v522
    %v539 = vmax.f32 %v507, %v523
    %v540 = vmax.f32 %v508, %v524
    %v541 = vmax.f32 %v509, %v525
    %v542 = vmax.f32 %v510, %v526
    %v543 = vmax.f32 %v511, %v527
    %v544 = vmax.f32 %v512, %v528
    %553 = vst [vmem:[#allocation1] ss:$4 sm:$0xff] %v537
    %s554 = scalar_lea.vmem [#allocation1], 1
    %555 = vst [vmem:[%s554] ss:$4 sm:$0xff] %v538
    %s556 = scalar_lea.vmem [#allocation1], 2
    %557 = vst [vmem:[%s556] ss:$4 sm:$0xff] %v539
    %s558 = scalar_lea.vmem [#allocation1], 3
    %559 = vst [vmem:[%s558] ss:$4 sm:$0xff] %v540
    %s560 = scalar_lea.vmem [#allocation1], 32
    %561 = vst [vmem:[%s560] ss:$4 sm:$0xff] %v541
    %s562 = scalar_lea.vmem [#allocation1], 33
    %563 = vst [vmem:[%s562] ss:$4 sm:$0xff] %v542
    %s564 = scalar_lea.vmem [#allocation1], 34
    %565 = vst [vmem:[%s564] ss:$4 sm:$0xff] %v543
    %s566 = scalar_lea.vmem [#allocation1], 35
    %567 = vst [vmem:[%s566] ss:$4 sm:$0xff] %v544
    %v568 = vld.sshfl [vmem:[#allocation1] sm:$0xff pattern:$0x73625140]
    %v569 = vld.sshfl [vmem:[#allocation1 + $0x20] sm:$0xff pattern:$0x73625140]
    %v570 = vrot.slane %v568, 7
    %v571 = vrot.slane %v569, 7
    %v572 = vsel %vm30, %v570, %v571
    %v576 = vsel %vm30, 0.0, %v570
    %v577 = vsel %vm30, %v571, 0.0
    %vm578 = vcmp.lt.s32.totalorder %v46, 0
    %v579 = vsub.s32 0, %v46
    %v580 = vsel %vm578, %v579, %v46
    %v581 = vshrl.u32 %v580, 3
    %v582 = vand.u32 %v580, 7
    %v583 = vsub.s32 0, %v582
    %v584 = vsel %vm578, %v583, %v582
    %vm585 = vcmp.lt.s32.totalorder %v47, 0
    %v586 = vsub.s32 0, %v47
    %v587 = vsel %vm585, %v586, %v47
    %v588 = vshrl.u32 %v587, 3
    %v589 = vand.u32 %v587, 7
    %v590 = vsub.s32 0, %v589
    %v591 = vsel %vm585, %v590, %v589
    %vm592 = vcmp.ne.s32.totalorder %v584, 0
    %vm593 = vcmp.ne.s32.totalorder %v591, 0
    %vm594 = vcmp.lt.s32.totalorder %v584, 0
    %vm595 = vcmp.lt.s32.totalorder %v591, 0
    %vm596 = vmand %vm594, %vm592
    %vm597 = vmand %vm595, %vm593
    %v598 = vadd.s32 %v584, 8
    %v599 = vadd.s32 %v591, 8
    %v600 = vsel %vm596, %v598, %v584
    %v601 = vsel %vm597, %v599, %v591
    %vm602 = vcmp.ge.s32.totalorder %v600, 1
    %vm603 = vcmp.ge.s32.totalorder %v601, 1
    %v604 = vsel %vm602, 1, 0
    %v605 = vsel %vm603, 1, 0
    %vm606 = vcmp.eq.s32.totalorder %v604, 1
    %vm607 = vcmp.eq.s32.totalorder %v605, 1
    %v608 = vsel %vm606, %v576, 0.0
    %v609 = vsel %vm607, %v572, 0.0
    %vm610 = vcmp.le.s32.totalorder %v600, 6
    %vm611 = vcmp.le.s32.totalorder %v601, 6
    %v612 = vsel %vm610, 1, 0
    %v613 = vsel %vm611, 1, 0
    %vm614 = vcmp.eq.s32.totalorder %v612, 1
    %vm615 = vcmp.eq.s32.totalorder %v613, 1
    %v618 = vrot.slane %v576, 2
    %v619 = vrot.slane %v572, 2
    %v620 = vsel %vm128, %v618, %v619
    %v621 = vrot.slane %v577, 2
    %v622 = vsel %vm128, %v619, %v621
    %v625 = vsel %vm614, %v620, 0.0
    %v626 = vsel %vm615, %v622, 0.0
    %v627 = vrot.slane %v576, 1
    %v628 = vrot.slane %v572, 1
    %v629 = vsel %vm146, %v627, %v628
    %v630 = vrot.slane %v577, 1
    %v631 = vsel %vm146, %v628, %v630
    %v634 = vpack.c.bf16 %v609, %v608
    %v635 = vpack.c.bf16 %v631, %v629
    %v636 = vpack.c.bf16 %v626, %v625
    %v637 = vpack.c.bf16 1.0, 1.0
    %v638 = vld [vmem:[%s2] sm:$0xff]
    %v639 = vld [vmem:[%s2 + $0x8] sm:$0xff]
    %v640 = vld [vmem:[%s2 + $0x10] sm:$0xff]
    %v641 = vld [vmem:[%s2 + $0x18] sm:$0xff]
    %v642 = vld [vmem:[%s2 + $0x20] sm:$0xff]
    %v643 = vld [vmem:[%s2 + $0x28] sm:$0xff]
    %v644 = vld [vmem:[%s2 + $0x30] sm:$0xff]
    %v645 = vld [vmem:[%s2 + $0x38] sm:$0xff]
    %v646 = vld [vmem:[%s2 + $0x40] sm:$0xff]
    %v647 = vld [vmem:[%s2 + $0x48] sm:$0xff]
    %v648 = vld [vmem:[%s2 + $0x50] sm:$0xff]
    %v649 = vld [vmem:[%s2 + $0x58] sm:$0xff]
    %v650 = vld [vmem:[%s2 + $0x60] sm:$0xff]
    %v651 = vld [vmem:[%s2 + $0x68] sm:$0xff]
    %v652 = vld [vmem:[%s2 + $0x70] sm:$0xff]
    %v653 = vld [vmem:[%s2 + $0x78] sm:$0xff]
    %v654 = vld [vmem:[%s2 + $0x80] sm:$0xff]
    %v655 = vld [vmem:[%s2 + $0x88] sm:$0xff]
    %v656 = vld [vmem:[%s2 + $0x90] sm:$0xff]
    %v657 = vld [vmem:[%s2 + $0x98] sm:$0xff]
    %v658 = vld [vmem:[%s2 + $0xa0] sm:$0xff]
    %v659 = vld [vmem:[%s2 + $0xa8] sm:$0xff]
    %v660 = vld [vmem:[%s2 + $0xb0] sm:$0xff]
    %v661 = vld [vmem:[%s2 + $0xb8] sm:$0xff]
    %v662 = vld [vmem:[%s2 + $0xc0] sm:$0xff]
    %v663 = vld [vmem:[%s2 + $0xc8] sm:$0xff]
    %v664 = vld [vmem:[%s2 + $0xd0] sm:$0xff]
    %v665 = vld [vmem:[%s2 + $0xd8] sm:$0xff]
    %v666 = vld [vmem:[%s2 + $0xe0] sm:$0xff]
    %v667 = vld [vmem:[%s2 + $0xe8] sm:$0xff]
    %v668 = vld [vmem:[%s2 + $0xf0] sm:$0xff]
    %v669 = vld [vmem:[%s2 + $0xf8] sm:$0xff]
    %v670 = vld [vmem:[%s2 + $0x100] sm:$0xff]
    %v671 = vld [vmem:[%s2 + $0x108] sm:$0xff]
    %v672 = vld [vmem:[%s2 + $0x110] sm:$0xff]
    %v673 = vld [vmem:[%s2 + $0x118] sm:$0xff]
    %v674 = vld [vmem:[%s2 + $0x120] sm:$0xff]
    %v675 = vld [vmem:[%s2 + $0x128] sm:$0xff]
    %v676 = vld [vmem:[%s2 + $0x130] sm:$0xff]
    %v677 = vld [vmem:[%s2 + $0x138] sm:$0xff]
    %v678 = vld [vmem:[%s2 + $0x140] sm:$0xff]
    %v679 = vld [vmem:[%s2 + $0x148] sm:$0xff]
    %v680 = vld [vmem:[%s2 + $0x150] sm:$0xff]
    %v681 = vld [vmem:[%s2 + $0x158] sm:$0xff]
    %v682 = vld [vmem:[%s2 + $0x160] sm:$0xff]
    %v683 = vld [vmem:[%s2 + $0x168] sm:$0xff]
    %v684 = vld [vmem:[%s2 + $0x170] sm:$0xff]
    %v685 = vld [vmem:[%s2 + $0x178] sm:$0xff]
    %v686 = vld [vmem:[%s2 + $0x180] sm:$0x11]
    %v736 = vunpack.c.l.b16 %v638
    %v737 = vunpack.c.h.b16 %v638
    %v738 = vunpack.c.l.b16 %v639
    %v739 = vunpack.c.h.b16 %v639
    %v740 = vunpack.c.l.b16 %v640
    %v741 = vunpack.c.h.b16 %v640
    %v742 = vunpack.c.l.b16 %v641
    %v743 = vunpack.c.h.b16 %v641
    %v744 = vunpack.c.l.b16 %v642
    %v745 = vunpack.c.h.b16 %v642
    %v746 = vunpack.c.l.b16 %v643
    %v747 = vunpack.c.h.b16 %v643
    %v748 = vunpack.c.l.b16 %v644
    %v749 = vunpack.c.h.b16 %v644
    %v750 = vunpack.c.l.b16 %v645
    %v751 = vunpack.c.h.b16 %v645
    %v752 = vunpack.c.l.b16 %v646
    %v753 = vunpack.c.h.b16 %v646
    %v754 = vunpack.c.l.b16 %v647
    %v755 = vunpack.c.h.b16 %v647
    %v756 = vunpack.c.l.b16 %v648
    %v757 = vunpack.c.h.b16 %v648
    %v758 = vunpack.c.l.b16 %v649
    %v759 = vunpack.c.h.b16 %v649
    %v760 = vunpack.c.l.b16 %v650
    %v761 = vunpack.c.h.b16 %v650
    %v762 = vunpack.c.l.b16 %v651
    %v763 = vunpack.c.h.b16 %v651
    %v764 = vunpack.c.l.b16 %v652
    %v765 = vunpack.c.h.b16 %v652
    %v766 = vunpack.c.l.b16 %v653
    %v767 = vunpack.c.h.b16 %v653
    %v768 = vunpack.c.l.b16 %v654
    %v769 = vunpack.c.h.b16 %v654
    %v770 = vunpack.c.l.b16 %v655
    %v771 = vunpack.c.h.b16 %v655
    %v772 = vunpack.c.l.b16 %v656
    %v773 = vunpack.c.h.b16 %v656
    %v774 = vunpack.c.l.b16 %v657
    %v775 = vunpack.c.h.b16 %v657
    %v776 = vunpack.c.l.b16 %v658
    %v777 = vunpack.c.h.b16 %v658
    %v778 = vunpack.c.l.b16 %v659
    %v779 = vunpack.c.h.b16 %v659
    %v780 = vunpack.c.l.b16 %v660
    %v781 = vunpack.c.h.b16 %v660
    %v782 = vunpack.c.l.b16 %v661
    %v783 = vunpack.c.h.b16 %v661
    %v784 = vunpack.c.l.b16 %v662
    %v785 = vunpack.c.h.b16 %v662
    %v786 = vunpack.c.l.b16 %v663
    %v787 = vunpack.c.h.b16 %v663
    %v788 = vunpack.c.l.b16 %v664
    %v789 = vunpack.c.h.b16 %v664
    %v790 = vunpack.c.l.b16 %v665
    %v791 = vunpack.c.h.b16 %v665
    %v792 = vunpack.c.l.b16 %v666
    %v793 = vunpack.c.h.b16 %v666
    %v794 = vunpack.c.l.b16 %v667
    %v795 = vunpack.c.h.b16 %v667
    %v796 = vunpack.c.l.b16 %v668
    %v797 = vunpack.c.h.b16 %v668
    %v798 = vunpack.c.l.b16 %v669
    %v799 = vunpack.c.h.b16 %v669
    %v800 = vunpack.c.l.b16 %v670
    %v801 = vunpack.c.h.b16 %v670
    %v802 = vunpack.c.l.b16 %v671
    %v803 = vunpack.c.h.b16 %v671
    %v804 = vunpack.c.l.b16 %v672
    %v805 = vunpack.c.h.b16 %v672
    %v806 = vunpack.c.l.b16 %v673
    %v807 = vunpack.c.h.b16 %v673
    %v808 = vunpack.c.l.b16 %v674
    %v809 = vunpack.c.h.b16 %v674
    %v810 = vunpack.c.l.b16 %v675
    %v811 = vunpack.c.h.b16 %v675
    %v812 = vunpack.c.l.b16 %v676
    %v813 = vunpack.c.h.b16 %v676
    %v814 = vunpack.c.l.b16 %v677
    %v815 = vunpack.c.h.b16 %v677
    %v816 = vunpack.c.l.b16 %v678
    %v817 = vunpack.c.h.b16 %v678
    %v818 = vunpack.c.l.b16 %v679
    %v819 = vunpack.c.h.b16 %v679
    %v820 = vunpack.c.l.b16 %v680
    %v821 = vunpack.c.h.b16 %v680
    %v822 = vunpack.c.l.b16 %v681
    %v823 = vunpack.c.h.b16 %v681
    %v824 = vunpack.c.l.b16 %v682
    %v825 = vunpack.c.h.b16 %v682
    %v826 = vunpack.c.l.b16 %v683
    %v827 = vunpack.c.h.b16 %v683
    %v828 = vunpack.c.l.b16 %v684
    %v829 = vunpack.c.h.b16 %v684
    %v830 = vunpack.c.l.b16 %v685
    %v831 = vunpack.c.h.b16 %v685
    %v832 = vunpack.c.l.b16 %v686
    %v833 = vunpack.c.h.b16 %v686
    %v834 = vpack.c.b16 %v738, %v736
    %v835 = vpack.c.b16 %v739, %v737
    %v836 = vpack.c.b16 %v742, %v740
    %v837 = vpack.c.b16 %v743, %v741
    %v838 = vpack.c.b16 %v746, %v744
    %v839 = vpack.c.b16 %v747, %v745
    %v840 = vpack.c.b16 %v750, %v748
    %v841 = vpack.c.b16 %v751, %v749
    %v842 = vpack.c.b16 %v754, %v752
    %v843 = vpack.c.b16 %v755, %v753
    %v844 = vpack.c.b16 %v758, %v756
    %v845 = vpack.c.b16 %v759, %v757
    %v846 = vpack.c.b16 %v762, %v760
    %v847 = vpack.c.b16 %v763, %v761
    %v848 = vpack.c.b16 %v766, %v764
    %v849 = vpack.c.b16 %v767, %v765
    %v850 = vpack.c.b16 %v770, %v768
    %v851 = vpack.c.b16 %v771, %v769
    %v852 = vpack.c.b16 %v774, %v772
    %v853 = vpack.c.b16 %v775, %v773
    %v854 = vpack.c.b16 %v778, %v776
    %v855 = vpack.c.b16 %v779, %v777
    %v856 = vpack.c.b16 %v782, %v780
    %v857 = vpack.c.b16 %v783, %v781
    %v858 = vpack.c.b16 %v786, %v784
    %v859 = vpack.c.b16 %v787, %v785
    %v860 = vpack.c.b16 %v790, %v788
    %v861 = vpack.c.b16 %v791, %v789
    %v862 = vpack.c.b16 %v794, %v792
    %v863 = vpack.c.b16 %v795, %v793
    %v864 = vpack.c.b16 %v798, %v796
    %v865 = vpack.c.b16 %v799, %v797
    %v866 = vpack.c.b16 %v802, %v800
    %v867 = vpack.c.b16 %v803, %v801
    %v868 = vpack.c.b16 %v806, %v804
    %v869 = vpack.c.b16 %v807, %v805
    %v870 = vpack.c.b16 %v810, %v808
    %v871 = vpack.c.b16 %v811, %v809
    %v872 = vpack.c.b16 %v814, %v812
    %v873 = vpack.c.b16 %v815, %v813
    %v874 = vpack.c.b16 %v818, %v816
    %v875 = vpack.c.b16 %v819, %v817
    %v876 = vpack.c.b16 %v822, %v820
    %v877 = vpack.c.b16 %v823, %v821
    %v878 = vpack.c.b16 %v826, %v824
    %v879 = vpack.c.b16 %v827, %v825
    %v880 = vpack.c.b16 %v830, %v828
    %v881 = vpack.c.b16 %v831, %v829
    %v882 = vpack.c.b16 %v832, %v832
    %v883 = vpack.c.b16 %v833, %v833
    %vm932 = vcmask 7168
    %v934 = vsel %vm932, %v637, 0
    %v937 = vand.u32 %v882, %v325
    %v940 = vand.u32 %v883, %v325
    %942 = vmatpush.bf16.msra.mxu0 %v848
    %943 = vmatpush.bf16.msra.mxu0 %v846
    %944 = vmatpush.bf16.msra.mxu0 %v844
    %945 = vmatpush.bf16.msra.mxu0 %v842
    %946 = vmatpush.bf16.msra.mxu0 %v840
    %947 = vmatpush.bf16.msra.mxu0 %v838
    %948 = vmatpush.bf16.msra.mxu0 %v836
    %949 = vmatpush.bf16.msra.mxu0 %v834
    %950 = vmatmul.bf16.gmra.mxu0 %v634
    %v951 = vpop.f32.mrf.mxu0
    %v952 = vadd.f32 0.0, %v951
    %v953 = vpop.f32.mrf.mxu0
    %v954 = vadd.f32 0.0, %v953
    %955 = vdwg.mxu0
    %956 = vmatpush.bf16.msra.mxu0 %v864
    %957 = vmatpush.bf16.msra.mxu0 %v862
    %958 = vmatpush.bf16.msra.mxu0 %v860
    %959 = vmatpush.bf16.msra.mxu0 %v858
    %960 = vmatpush.bf16.msra.mxu0 %v856
    %961 = vmatpush.bf16.msra.mxu0 %v854
    %962 = vmatpush.bf16.msra.mxu0 %v852
    %963 = vmatpush.bf16.msra.mxu0 %v850
    %964 = vmatmul.bf16.gmra.mxu0 %v635
    %v965 = vpop.f32.mrf.mxu0
    %v966 = vadd.f32 %v952, %v965
    %v967 = vpop.f32.mrf.mxu0
    %v968 = vadd.f32 %v954, %v967
    %969 = vdwg.mxu0
    %970 = vmatpush.bf16.msra.mxu0 %v880
    %971 = vmatpush.bf16.msra.mxu0 %v878
    %972 = vmatpush.bf16.msra.mxu0 %v876
    %973 = vmatpush.bf16.msra.mxu0 %v874
    %974 = vmatpush.bf16.msra.mxu0 %v872
    %975 = vmatpush.bf16.msra.mxu0 %v870
    %976 = vmatpush.bf16.msra.mxu0 %v868
    %977 = vmatpush.bf16.msra.mxu0 %v866
    %978 = vmatmul.bf16.gmra.mxu0 %v636
    %v979 = vpop.f32.mrf.mxu0
    %v980 = vadd.f32 %v966, %v979
    %v981 = vpop.f32.mrf.mxu0
    %v982 = vadd.f32 %v968, %v981
    %983 = vdwg.mxu0
    %984 = vmatpush.bf16.msra.mxu0 0
    %985 = vmatpush.bf16.msra.mxu0 0
    %986 = vmatpush.bf16.msra.mxu0 0
    %987 = vmatpush.bf16.msra.mxu0 0
    %988 = vmatpush.bf16.msra.mxu0 0
    %989 = vmatpush.bf16.msra.mxu0 0
    %990 = vmatpush.bf16.msra.mxu0 0
    %991 = vmatpush.bf16.msra.mxu0 %v937
    %992 = vmatmul.bf16.gmra.mxu0 %v934
    %v993 = vpop.f32.mrf.mxu0
    %v994 = vadd.f32 %v980, %v993
    %v995 = vpop.f32.mrf.mxu0
    %v996 = vadd.f32 %v982, %v995
    %997 = vdwg.mxu0
    %998 = vmatpush.bf16.msra.mxu0 %v849
    %999 = vmatpush.bf16.msra.mxu0 %v847
    %1000 = vmatpush.bf16.msra.mxu0 %v845
    %1001 = vmatpush.bf16.msra.mxu0 %v843
    %1002 = vmatpush.bf16.msra.mxu0 %v841
    %1003 = vmatpush.bf16.msra.mxu0 %v839
    %1004 = vmatpush.bf16.msra.mxu0 %v837
    %1005 = vmatpush.bf16.msra.mxu0 %v835
    %1006 = vmatmul.bf16.gmra.mxu0 %v634
    %v1007 = vpop.f32.mrf.mxu0
    %v1008 = vadd.f32 0.0, %v1007
    %v1009 = vpop.f32.mrf.mxu0
    %v1010 = vadd.f32 0.0, %v1009
    %1011 = vdwg.mxu0
    %1012 = vmatpush.bf16.msra.mxu0 %v865
    %1013 = vmatpush.bf16.msra.mxu0 %v863
    %1014 = vmatpush.bf16.msra.mxu0 %v861
    %1015 = vmatpush.bf16.msra.mxu0 %v859
    %1016 = vmatpush.bf16.msra.mxu0 %v857
    %1017 = vmatpush.bf16.msra.mxu0 %v855
    %1018 = vmatpush.bf16.msra.mxu0 %v853
    %1019 = vmatpush.bf16.msra.mxu0 %v851
    %1020 = vmatmul.bf16.gmra.mxu0 %v635
    %v1021 = vpop.f32.mrf.mxu0
    %v1022 = vadd.f32 %v1008, %v1021
    %v1023 = vpop.f32.mrf.mxu0
    %v1024 = vadd.f32 %v1010, %v1023
    %1025 = vdwg.mxu0
    %1026 = vmatpush.bf16.msra.mxu0 %v881
    %1027 = vmatpush.bf16.msra.mxu0 %v879
    %1028 = vmatpush.bf16.msra.mxu0 %v877
    %1029 = vmatpush.bf16.msra.mxu0 %v875
    %1030 = vmatpush.bf16.msra.mxu0 %v873
    %1031 = vmatpush.bf16.msra.mxu0 %v871
    %1032 = vmatpush.bf16.msra.mxu0 %v869
    %1033 = vmatpush.bf16.msra.mxu0 %v867
    %1034 = vmatmul.bf16.gmra.mxu0 %v636
    %v1035 = vpop.f32.mrf.mxu0
    %v1036 = vadd.f32 %v1022, %v1035
    %v1037 = vpop.f32.mrf.mxu0
    %v1038 = vadd.f32 %v1024, %v1037
    %1039 = vdwg.mxu0
    %1040 = vmatpush.bf16.msra.mxu0 0
    %1041 = vmatpush.bf16.msra.mxu0 0
    %1042 = vmatpush.bf16.msra.mxu0 0
    %1043 = vmatpush.bf16.msra.mxu0 0
    %1044 = vmatpush.bf16.msra.mxu0 0
    %1045 = vmatpush.bf16.msra.mxu0 0
    %1046 = vmatpush.bf16.msra.mxu0 0
    %1047 = vmatpush.bf16.msra.mxu0 %v940
    %1048 = vmatmul.bf16.gmra.mxu0 %v934
    %v1049 = vpop.f32.mrf.mxu0
    %v1050 = vadd.f32 %v1036, %v1049
    %v1051 = vpop.f32.mrf.mxu0
    %v1052 = vadd.f32 %v1038, %v1051
    %1053 = vdwg.mxu0
    %v1054 = vmax.f32 %v994, 0.0
    %v1055 = vmax.f32 %v1050, 0.0
    %v1056 = vmax.f32 %v996, 0.0
    %v1057 = vmax.f32 %v1052, 0.0
    %v1062 = vrot.slane %v1055, 4
    %v1063 = vrot.slane %v1057, 4
    %v1064 = vsel %vm428, %v1054, %v1062
    %v1065 = vsel %vm428, %v1062, %v1054
    %v1066 = vrot.slane %v1065, 4
    %v1067 = vsel %vm428, %v1056, %v1063
    %v1068 = vsel %vm428, %v1063, %v1056
    %v1069 = vrot.slane %v1068, 4
    %v1075 = vunpack.c.l.s4 1966171168
    %v1076 = vunpack.c.0.s8 %v1075
    %v1077 = vperm.slane %v1064, %v1076
    %v1079 = vunpack.c.l.s4 1966171168
    %v1080 = vunpack.c.0.s8 %v1079
    %v1081 = vperm.slane %v1066, %v1080
    %v1083 = vunpack.c.l.s4 1966171168
    %v1084 = vunpack.c.0.s8 %v1083
    %v1085 = vperm.slane %v1067, %v1084
    %v1087 = vunpack.c.l.s4 1966171168
    %v1088 = vunpack.c.0.s8 %v1087
    %v1089 = vperm.slane %v1069, %v1088
    %v1094 = vrot.slane %v1077, 4
    %v1095 = vrot.slane %v1081, 4
    %v1096 = vrot.slane %v1085, 4
    %v1097 = vrot.slane %v1089, 4
    %v1102 = vmax.f32 %v1077, %v1094
    %v1103 = vmax.f32 %v1081, %v1095
    %v1104 = vmax.f32 %v1085, %v1096
    %v1105 = vmax.f32 %v1089, %v1097
    %v1110 = vrot.slane %v1102, 2
    %v1111 = vrot.slane %v1103, 2
    %v1112 = vrot.slane %v1104, 2
    %v1113 = vrot.slane %v1105, 2
    %v1118 = vmax.f32 %v1102, %v1110
    %v1119 = vmax.f32 %v1103, %v1111
    %v1120 = vmax.f32 %v1104, %v1112
    %v1121 = vmax.f32 %v1105, %v1113
    %1126 = vst [vmem:[#allocation1] ss:$4 sm:$0xff] %v1118
    %s1127 = scalar_lea.vmem [#allocation1], 1
    %1128 = vst [vmem:[%s1127] ss:$4 sm:$0xff] %v1119
    %s1129 = scalar_lea.vmem [#allocation1], 2
    %1130 = vst [vmem:[%s1129] ss:$4 sm:$0xff] %v1120
    %s1131 = scalar_lea.vmem [#allocation1], 3
    %1132 = vst [vmem:[%s1131] ss:$4 sm:$0xff] %v1121
    %v1133 = vld.sshfl [vmem:[#allocation1] sm:$0xff pattern:$0x73625140]
    %v1136 = vunpack.c.l.s4 1935823168
    %v1137 = vunpack.c.0.s8 %v1136
    %v1138 = vperm.slane %v1133, %v1137
    %1140 = vst [vmem:[#allocation1] ss:$4 sm:$0xff] %v1138
    %v1141 = vld.sshfl [vmem:[#allocation1] sm:$0xff pattern:$0x73625140]
    %v1142 = vld.sshfl [vmem:[#allocation1 + $0x8] sm:$0xff pattern:$0x73625140]
    %v1143 = vld.sshfl [vmem:[#allocation1 + $0x10] sm:$0xff pattern:$0x73625140]
    %v1144 = vld.sshfl [vmem:[#allocation1 + $0x18] sm:$0xff pattern:$0x73625140]
    %v1149 = vpack.c.bf16 %v1141, %v1141
    %v1150 = vpack.c.bf16 %v1142, %v1142
    %v1151 = vpack.c.bf16 %v1143, %v1143
    %v1152 = vpack.c.bf16 %v1144, %v1144
    %v1153 = vld [vmem:[%s3] sm:$0xf]
    %v1154 = vld [vmem:[%s3 + $0x4] sm:$0xf]
    %v1155 = vld [vmem:[%s3 + $0x8] sm:$0xf]
    %v1156 = vld [vmem:[%s3 + $0xc] sm:$0xf]
    %v1157 = vld [vmem:[%s3 + $0x10] sm:$0xf]
    %v1158 = vld [vmem:[%s3 + $0x14] sm:$0xf]
    %v1159 = vld [vmem:[%s3 + $0x18] sm:$0xf]
    %v1160 = vld [vmem:[%s3 + $0x1c] sm:$0xf]
    %v1161 = vld [vmem:[%s3 + $0x20] sm:$0xf]
    %v1162 = vld [vmem:[%s3 + $0x24] sm:$0xf]
    %v1163 = vld [vmem:[%s3 + $0x28] sm:$0xf]
    %v1164 = vld [vmem:[%s3 + $0x2c] sm:$0xf]
    %v1165 = vld [vmem:[%s3 + $0x30] sm:$0xf]
    %v1166 = vld [vmem:[%s3 + $0x34] sm:$0xf]
    %v1167 = vld [vmem:[%s3 + $0x38] sm:$0xf]
    %v1168 = vld [vmem:[%s3 + $0x3c] sm:$0xf]
    %v1169 = vld [vmem:[%s3 + $0x40] sm:$0xf]
    %v1170 = vld [vmem:[%s3 + $0x44] sm:$0xf]
    %v1171 = vld [vmem:[%s3 + $0x48] sm:$0xf]
    %v1172 = vld [vmem:[%s3 + $0x4c] sm:$0xf]
    %v1173 = vld [vmem:[%s3 + $0x50] sm:$0xf]
    %v1174 = vld [vmem:[%s3 + $0x54] sm:$0xf]
    %v1175 = vld [vmem:[%s3 + $0x58] sm:$0xf]
    %v1176 = vld [vmem:[%s3 + $0x5c] sm:$0xf]
    %v1177 = vld [vmem:[%s3 + $0x60] sm:$0xf]
    %v1178 = vld [vmem:[%s3 + $0x64] sm:$0xf]
    %v1179 = vld [vmem:[%s3 + $0x68] sm:$0xf]
    %v1180 = vld [vmem:[%s3 + $0x6c] sm:$0xf]
    %v1181 = vld [vmem:[%s3 + $0x70] sm:$0xf]
    %v1182 = vld [vmem:[%s3 + $0x74] sm:$0xf]
    %v1183 = vld [vmem:[%s3 + $0x78] sm:$0xf]
    %v1184 = vld [vmem:[%s3 + $0x7c] sm:$0xf]
    %v1185 = vld [vmem:[%s3 + $0x80] sm:$0xf]
    %v1186 = vld [vmem:[%s3 + $0x84] sm:$0xf]
    %v1187 = vld [vmem:[%s3 + $0x88] sm:$0xf]
    %v1188 = vld [vmem:[%s3 + $0x8c] sm:$0xf]
    %v1189 = vld [vmem:[%s3 + $0x90] sm:$0xf]
    %v1190 = vld [vmem:[%s3 + $0x94] sm:$0xf]
    %v1191 = vld [vmem:[%s3 + $0x98] sm:$0xf]
    %v1192 = vld [vmem:[%s3 + $0x9c] sm:$0xf]
    %v1193 = vld [vmem:[%s3 + $0xa0] sm:$0xf]
    %v1194 = vld [vmem:[%s3 + $0xa4] sm:$0xf]
    %v1195 = vld [vmem:[%s3 + $0xa8] sm:$0xf]
    %v1196 = vld [vmem:[%s3 + $0xac] sm:$0xf]
    %v1197 = vld [vmem:[%s3 + $0xb0] sm:$0xf]
    %v1198 = vld [vmem:[%s3 + $0xb4] sm:$0xf]
    %v1199 = vld [vmem:[%s3 + $0xb8] sm:$0xf]
    %v1200 = vld [vmem:[%s3 + $0xbc] sm:$0xf]
    %v1201 = vld [vmem:[%s3 + $0xc0] sm:$0xf]
    %v1202 = vld [vmem:[%s3 + $0xc4] sm:$0xf]
    %v1203 = vld [vmem:[%s3 + $0xc8] sm:$0xf]
    %v1204 = vld [vmem:[%s3 + $0xcc] sm:$0xf]
    %v1205 = vld [vmem:[%s3 + $0xd0] sm:$0xf]
    %v1206 = vld [vmem:[%s3 + $0xd4] sm:$0xf]
    %v1207 = vld [vmem:[%s3 + $0xd8] sm:$0xf]
    %v1208 = vld [vmem:[%s3 + $0xdc] sm:$0xf]
    %v1209 = vld [vmem:[%s3 + $0xe0] sm:$0xf]
    %v1210 = vld [vmem:[%s3 + $0xe4] sm:$0xf]
    %v1211 = vld [vmem:[%s3 + $0xe8] sm:$0xf]
    %v1212 = vld [vmem:[%s3 + $0xec] sm:$0xf]
    %v1213 = vld [vmem:[%s3 + $0xf0] sm:$0xf]
    %v1214 = vld [vmem:[%s3 + $0xf4] sm:$0xf]
    %v1215 = vld [vmem:[%s3 + $0xf8] sm:$0xf]
    %v1216 = vld [vmem:[%s3 + $0xfc] sm:$0xf]
    %v1217 = vld [vmem:[%s3 + $0x100] sm:$0x1]
    %v1283 = vunpack.c.l.b16 %v1153
    %v1284 = vunpack.c.l.b16 %v1154
    %v1285 = vunpack.c.l.b16 %v1155
    %v1286 = vunpack.c.l.b16 %v1156
    %v1287 = vunpack.c.l.b16 %v1157
    %v1288 = vunpack.c.l.b16 %v1158
    %v1289 = vunpack.c.l.b16 %v1159
    %v1290 = vunpack.c.l.b16 %v1160
    %v1291 = vunpack.c.l.b16 %v1161
    %v1292 = vunpack.c.l.b16 %v1162
    %v1293 = vunpack.c.l.b16 %v1163
    %v1294 = vunpack.c.l.b16 %v1164
    %v1295 = vunpack.c.l.b16 %v1165
    %v1296 = vunpack.c.l.b16 %v1166
    %v1297 = vunpack.c.l.b16 %v1167
    %v1298 = vunpack.c.l.b16 %v1168
    %v1299 = vunpack.c.l.b16 %v1169
    %v1300 = vunpack.c.l.b16 %v1170
    %v1301 = vunpack.c.l.b16 %v1171
    %v1302 = vunpack.c.l.b16 %v1172
    %v1303 = vunpack.c.l.b16 %v1173
    %v1304 = vunpack.c.l.b16 %v1174
    %v1305 = vunpack.c.l.b16 %v1175
    %v1306 = vunpack.c.l.b16 %v1176
    %v1307 = vunpack.c.l.b16 %v1177
    %v1308 = vunpack.c.l.b16 %v1178
    %v1309 = vunpack.c.l.b16 %v1179
    %v1310 = vunpack.c.l.b16 %v1180
    %v1311 = vunpack.c.l.b16 %v1181
    %v1312 = vunpack.c.l.b16 %v1182
    %v1313 = vunpack.c.l.b16 %v1183
    %v1314 = vunpack.c.l.b16 %v1184
    %v1315 = vunpack.c.l.b16 %v1185
    %v1316 = vunpack.c.l.b16 %v1186
    %v1317 = vunpack.c.l.b16 %v1187
    %v1318 = vunpack.c.l.b16 %v1188
    %v1319 = vunpack.c.l.b16 %v1189
    %v1320 = vunpack.c.l.b16 %v1190
    %v1321 = vunpack.c.l.b16 %v1191
    %v1322 = vunpack.c.l.b16 %v1192
    %v1323 = vunpack.c.l.b16 %v1193
    %v1324 = vunpack.c.l.b16 %v1194
    %v1325 = vunpack.c.l.b16 %v1195
    %v1326 = vunpack.c.l.b16 %v1196
    %v1327 = vunpack.c.l.b16 %v1197
    %v1328 = vunpack.c.l.b16 %v1198
    %v1329 = vunpack.c.l.b16 %v1199
    %v1330 = vunpack.c.l.b16 %v1200
    %v1331 = vunpack.c.l.b16 %v1201
    %v1332 = vunpack.c.l.b16 %v1202
    %v1333 = vunpack.c.l.b16 %v1203
    %v1334 = vunpack.c.l.b16 %v1204
    %v1335 = vunpack.c.l.b16 %v1205
    %v1336 = vunpack.c.l.b16 %v1206
    %v1337 = vunpack.c.l.b16 %v1207
    %v1338 = vunpack.c.l.b16 %v1208
    %v1339 = vunpack.c.l.b16 %v1209
    %v1340 = vunpack.c.l.b16 %v1210
    %v1341 = vunpack.c.l.b16 %v1211
    %v1342 = vunpack.c.l.b16 %v1212
    %v1343 = vunpack.c.l.b16 %v1213
    %v1344 = vunpack.c.l.b16 %v1214
    %v1345 = vunpack.c.l.b16 %v1215
    %v1346 = vunpack.c.l.b16 %v1216
    %v1347 = vunpack.c.l.b16 %v1217
    %v1348 = vpack.c.b16 %v1284, %v1283
    %v1349 = vpack.c.b16 %v1286, %v1285
    %v1350 = vpack.c.b16 %v1288, %v1287
    %v1351 = vpack.c.b16 %v1290, %v1289
    %v1352 = vpack.c.b16 %v1292, %v1291
    %v1353 = vpack.c.b16 %v1294, %v1293
    %v1354 = vpack.c.b16 %v1296, %v1295
    %v1355 = vpack.c.b16 %v1298, %v1297
    %v1356 = vpack.c.b16 %v1300, %v1299
    %v1357 = vpack.c.b16 %v1302, %v1301
    %v1358 = vpack.c.b16 %v1304, %v1303
    %v1359 = vpack.c.b16 %v1306, %v1305
    %v1360 = vpack.c.b16 %v1308, %v1307
    %v1361 = vpack.c.b16 %v1310, %v1309
    %v1362 = vpack.c.b16 %v1312, %v1311
    %v1363 = vpack.c.b16 %v1314, %v1313
    %v1364 = vpack.c.b16 %v1316, %v1315
    %v1365 = vpack.c.b16 %v1318, %v1317
    %v1366 = vpack.c.b16 %v1320, %v1319
    %v1367 = vpack.c.b16 %v1322, %v1321
    %v1368 = vpack.c.b16 %v1324, %v1323
    %v1369 = vpack.c.b16 %v1326, %v1325
    %v1370 = vpack.c.b16 %v1328, %v1327
    %v1371 = vpack.c.b16 %v1330, %v1329
    %v1372 = vpack.c.b16 %v1332, %v1331
    %v1373 = vpack.c.b16 %v1334, %v1333
    %v1374 = vpack.c.b16 %v1336, %v1335
    %v1375 = vpack.c.b16 %v1338, %v1337
    %v1376 = vpack.c.b16 %v1340, %v1339
    %v1377 = vpack.c.b16 %v1342, %v1341
    %v1378 = vpack.c.b16 %v1344, %v1343
    %v1379 = vpack.c.b16 %v1346, %v1345
    %v1380 = vpack.c.b16 %v1347, %v1347
    %v1414 = vand.u32 %v1380, %v325
    %1416 = vmatpush.bf16.msra.mxu0 %v1355
    %1417 = vmatpush.bf16.msra.mxu0 %v1354
    %1418 = vmatpush.bf16.msra.mxu0 %v1353
    %1419 = vmatpush.bf16.msra.mxu0 %v1352
    %1420 = vmatpush.bf16.msra.mxu0 %v1351
    %1421 = vmatpush.bf16.msra.mxu0 %v1350
    %1422 = vmatpush.bf16.msra.mxu0 %v1349
    %1423 = vmatpush.bf16.msra.mxu0 %v1348
    %1424 = vmatmul.bf16.gmra.mxu0 %v1149
    %v1425 = vpop.f32.mrf.mxu0
    %v1426 = vadd.f32 0.0, %v1425
    %v1427 = vpop.f32.mrf.mxu0
    %1428 = vdwg.mxu0
    %1429 = vmatpush.bf16.msra.mxu0 %v1363
    %1430 = vmatpush.bf16.msra.mxu0 %v1362
    %1431 = vmatpush.bf16.msra.mxu0 %v1361
    %1432 = vmatpush.bf16.msra.mxu0 %v1360
    %1433 = vmatpush.bf16.msra.mxu0 %v1359
    %1434 = vmatpush.bf16.msra.mxu0 %v1358
    %1435 = vmatpush.bf16.msra.mxu0 %v1357
    %1436 = vmatpush.bf16.msra.mxu0 %v1356
    %1437 = vmatmul.bf16.gmra.mxu0 %v1150
    %v1438 = vpop.f32.mrf.mxu0
    %v1439 = vadd.f32 %v1426, %v1438
    %v1440 = vpop.f32.mrf.mxu0
    %1441 = vdwg.mxu0
    %1442 = vmatpush.bf16.msra.mxu0 %v1371
    %1443 = vmatpush.bf16.msra.mxu0 %v1370
    %1444 = vmatpush.bf16.msra.mxu0 %v1369
    %1445 = vmatpush.bf16.msra.mxu0 %v1368
    %1446 = vmatpush.bf16.msra.mxu0 %v1367
    %1447 = vmatpush.bf16.msra.mxu0 %v1366
    %1448 = vmatpush.bf16.msra.mxu0 %v1365
    %1449 = vmatpush.bf16.msra.mxu0 %v1364
    %1450 = vmatmul.bf16.gmra.mxu0 %v1151
    %v1451 = vpop.f32.mrf.mxu0
    %v1452 = vadd.f32 %v1439, %v1451
    %v1453 = vpop.f32.mrf.mxu0
    %1454 = vdwg.mxu0
    %1455 = vmatpush.bf16.msra.mxu0 %v1379
    %1456 = vmatpush.bf16.msra.mxu0 %v1378
    %1457 = vmatpush.bf16.msra.mxu0 %v1377
    %1458 = vmatpush.bf16.msra.mxu0 %v1376
    %1459 = vmatpush.bf16.msra.mxu0 %v1375
    %1460 = vmatpush.bf16.msra.mxu0 %v1374
    %1461 = vmatpush.bf16.msra.mxu0 %v1373
    %1462 = vmatpush.bf16.msra.mxu0 %v1372
    %1463 = vmatmul.bf16.gmra.mxu0 %v1152
    %v1464 = vpop.f32.mrf.mxu0
    %v1465 = vadd.f32 %v1452, %v1464
    %v1466 = vpop.f32.mrf.mxu0
    %1467 = vdwg.mxu0
    %1468 = vmatpush.bf16.msra.mxu0 0
    %1469 = vmatpush.bf16.msra.mxu0 0
    %1470 = vmatpush.bf16.msra.mxu0 0
    %1471 = vmatpush.bf16.msra.mxu0 0
    %1472 = vmatpush.bf16.msra.mxu0 0
    %1473 = vmatpush.bf16.msra.mxu0 0
    %1474 = vmatpush.bf16.msra.mxu0 0
    %1475 = vmatpush.bf16.msra.mxu0 %v1414
    %1476 = vmatmul.bf16.gmra.mxu0 %v934
    %v1477 = vpop.f32.mrf.mxu0
    %v1478 = vadd.f32 %v1465, %v1477
    %v1479 = vpop.f32.mrf.mxu0
    %1480 = vdwg.mxu0
    %v1481 = vmax.f32 %v1478, 0.0
    %vm1482 = vcmask 523264
    %v1483 = vsel %vm1482, %v1481, 1.0
    %v1484 = vpack.c.bf16 %v1483, %v1483
    %v1485 = vld [vmem:[%s4] sm:$0xf]
    %v1486 = vld [vmem:[%s4 + $0x4] sm:$0xf]
    %v1487 = vld [vmem:[%s4 + $0x8] sm:$0xf]
    %v1488 = vld [vmem:[%s4 + $0xc] sm:$0xf]
    %v1489 = vld [vmem:[%s4 + $0x10] sm:$0xf]
    %v1490 = vld [vmem:[%s4 + $0x14] sm:$0xf]
    %v1491 = vld [vmem:[%s4 + $0x18] sm:$0xf]
    %v1492 = vld [vmem:[%s4 + $0x1c] sm:$0xf]
    %v1493 = vld [vmem:[%s4 + $0x20] sm:$0x1]
    %v1503 = vunpack.c.l.b16 %v1485
    %v1504 = vunpack.c.l.b16 %v1486
    %v1505 = vunpack.c.l.b16 %v1487
    %v1506 = vunpack.c.l.b16 %v1488
    %v1507 = vunpack.c.l.b16 %v1489
    %v1508 = vunpack.c.l.b16 %v1490
    %v1509 = vunpack.c.l.b16 %v1491
    %v1510 = vunpack.c.l.b16 %v1492
    %v1511 = vunpack.c.l.b16 %v1493
    %v1512 = vpack.c.b16 %v1504, %v1503
    %v1513 = vpack.c.b16 %v1506, %v1505
    %v1514 = vpack.c.b16 %v1508, %v1507
    %v1515 = vpack.c.b16 %v1510, %v1509
    %v1516 = vpack.c.b16 %v1511, %v1511
    %vm1521 = vcmask 531456
    %v1523 = vsel %vm1521, %v1484, 0
    %v1526 = vand.u32 %v1516, %v325
    %1528 = vmatpush.bf16.msra.mxu0 0
    %1529 = vmatpush.bf16.msra.mxu0 0
    %1530 = vmatpush.bf16.msra.mxu0 0
    %1531 = vmatpush.bf16.msra.mxu0 %v1526
    %1532 = vmatpush.bf16.msra.mxu0 %v1515
    %1533 = vmatpush.bf16.msra.mxu0 %v1514
    %1534 = vmatpush.bf16.msra.mxu0 %v1513
    %1535 = vmatpush.bf16.msra.mxu0 %v1512
    %1536 = vmatmul.bf16.gmra.mxu0 %v1523
    %v1537 = vpop.f32.mrf.mxu0
    %v1538 = vadd.f32 0.0, %v1537
    %v1539 = vpop.f32.mrf.mxu0
    %1540 = vdwg.mxu0
    %vm1541 = vcmask 9216
    %1542 = vst.msk [vmem:[#allocation2] sm:$0x3] %vm1541, %v1538
    // Predicated region
    $region22: #{simple_model_forward.1} parent=1 // pred_check
      _
    $region23: #{simple_model_forward.1} parent=1 // pred_check_branch
      %1544 = sbr.rel (0) target = $region25
    $region24: #{simple_model_forward.1} parent=1 // pred_region
      %1546 = vsyncadd [#allocation3], 0
      %s1548 = sshll.u32 [#allocation2], 4
      %s1549 = int_to_ptr.vmem [resolvable:$true] %s1548
      %s1550 = sshll.u32 %s5, 4
      %s1551 = int_to_ptr.hbm [resolvable:$true] %s1550
      %1553 = dma.vmem_to_hbm [thread:$0]  %s1549, 32, %s1551, [#allocation3]
    $region25: #{simple_model_forward.1} parent=1 // pred_fallthru
      _
    // Predicated region
    $region26: #{simple_model_forward.1} parent=1 // pred_check
      _
    $region27: #{simple_model_forward.1} parent=1 // pred_check_branch
      %1555 = sbr.rel (0) target = $region29
    $region28: #{simple_model_forward.1} parent=1 // pred_region
      %1557 = dma.done [#allocation3], 32
    $region29: #{simple_model_forward.1} parent=1 // pred_fallthru
      _
    %1558 = vsyncpa [#allocation3], 1

</llo_original>
